<compile_context>
chip_gen: v5e
topology: v5e:2x2
jax: 0.10.0
libtpu: 0.0.40
codegen_flags: <defaults>
</compile_context>

<pallas_src>
import jax
import jax.numpy as jnp
import numpy as np
from jax.experimental import pallas as pl
from jax.experimental.pallas import tpu as pltpu


def self_attention_kernel(q_ref, v_ref, w1_ref, b1_ref, vw_ref, bv_ref,
                          ctx_ref, score_ref):
    # q_ref:     (B*T, IN)   flattened query              (VMEM)
    # v_ref:     (B, T, DV)  values                       (VMEM)
    # w1_ref:    (IN, OUT)   W1 weight (transposed)       (VMEM)
    # b1_ref:    (1, OUT)    W1 bias                      (VMEM)
    # vw_ref:    (1, OUT)    V weight row                 (VMEM)
    # bv_ref:    (1, 1)      V bias scalar                (SMEM)
    # ctx_ref:   (B, DV)     context_vector output
    # score_ref: (B, T)      lane-dense score output (wrapper adds trailing dim)
    B, T = score_ref.shape

    # ---- W1(query) -> tanh  (single MXU matmul + EUP tanh) -----------------
    h = jnp.tanh(
        jnp.dot(q_ref[...], w1_ref[...], preferred_element_type=jnp.float32)
        + b1_ref[...]                                        # (1, OUT) broadcast
    )                                                        # (B*T, OUT)

    # ---- V(...) -> sigmoid  (VPU multiply + lane reduce; no N=1 MXU pass) --
    logits = jnp.sum(h * vw_ref[...], axis=-1, keepdims=True) + bv_ref[0, 0]
    s = jax.nn.sigmoid(logits).reshape(B, T)                 # tiny value relayout
    score_ref[...] = s                                       # lane-dense store

    # ---- attention_weights = score / sum(score, dim=1) ---------------------
    denom = jnp.sum(s, axis=1, keepdims=True)                # (B, 1)
    inv = pl.reciprocal(denom, approx=False)                 # exact reciprocal
    # replicate the torch broadcast (B,T,1)/(B,1) == (B,T,1)/(1,B,1):
    # the divisor for element [b, t] is denom[t]  (requires T == B, as in torch)
    weights = s * inv.reshape(1, B)                          # (B, T)

    # ---- context_vector = sum(weights * values, dim=1) ---------------------
    # weights -> (B, T, 1) broadcast over DV lanes, sublane (XLU) reduce over T
    ctx_ref[...] = jnp.sum(weights[:, :, None] * v_ref[...], axis=1)   # (B, DV)


def self_attention(query, values, w1_t, b1, vw_row, bv):
    B, T, DIN = query.shape
    DV = values.shape[2]
    DOUT = w1_t.shape[1]
    # torch's (B,T,1)/(B,1) broadcast (which this kernel reproduces) needs T==B
    assert T == B, "torch broadcast in the reference module requires T == B"

    # Flatten in the wrapper: pure layout plumbing in XLA, avoids an in-kernel
    # VMEM reshape of the query tile and gives the MXU one dense (B*T, IN) tile.
    q2d = query.reshape(B * T, DIN)

    out_shapes = (
        jax.ShapeDtypeStruct((B, DV), jnp.float32),   # context_vector
        jax.ShapeDtypeStruct((B, T), jnp.float32),    # score (lane-dense)
    )

    ctx, score2d = pl.pallas_call(
        self_attention_kernel,
        out_shape=out_shapes,
        in_specs=[
            pl.BlockSpec((B * T, DIN), lambda: (0, 0)),
            pl.BlockSpec((B, T, DV), lambda: (0, 0, 0)),
            pl.BlockSpec((DIN, DOUT), lambda: (0, 0)),
            pl.BlockSpec((1, DOUT), lambda: (0, 0)),
            pl.BlockSpec((1, DOUT), lambda: (0, 0)),
            pl.BlockSpec(memory_space=pltpu.MemorySpace.SMEM),   # bv scalar
        ],
        out_specs=[
            pl.BlockSpec((B, DV), lambda: (0, 0)),
            pl.BlockSpec((B, T), lambda: (0, 0)),
        ],
        # At these toy shapes the kernel is a single gridless block (< 100 KiB
        # VMEM). For real shapes, tile the B*T rows with a grid axis marked
        # dimension_semantics=("parallel",) so both v7x TensorCores are used.
    )(q2d, values, w1_t, b1, vw_row, bv)

    # add the trailing unit dim outside the kernel (free in XLA)
    return ctx, score2d.reshape(B, T, 1)


def reference(query, values, w1_t, b1, vw_row, bv):
    # pure-JAX reference with identical (torch-style) broadcasting
    h = jnp.tanh(jnp.einsum("bti,io->bto", query, w1_t) + b1.reshape(-1))
    score = jax.nn.sigmoid(
        jnp.sum(h * vw_row.reshape(-1), axis=-1, keepdims=True) + bv.reshape(())
    )                                                    # (B, T, 1)
    denom = jnp.sum(score, axis=1)                       # (B, 1)
    attn = score / denom                                 # (B,T,1)/(B,1) -> needs T==B
    ctx = jnp.sum(attn * values, axis=1)
    return ctx, score


if __name__ == "__main__":
    # small shapes consistent with the module; T == B so the torch broadcast is valid
    B, T = 8, 8
    IN_UNITS, OUT_UNITS, DV = 32, 16, 16

    key = jax.random.PRNGKey(0)
    kq, kv, kw1, kb1, kvw, kbv = jax.random.split(key, 6)

    query = jax.random.normal(kq, (B, T, IN_UNITS), dtype=jnp.float32)
    values = jax.random.normal(kv, (B, T, DV), dtype=jnp.float32)

    # deterministic nn.Linear-style init (uniform +- 1/sqrt(fan_in))
    lim1 = 1.0 / np.sqrt(IN_UNITS)
    limv = 1.0 / np.sqrt(OUT_UNITS)
    w1_t = jax.random.uniform(kw1, (IN_UNITS, OUT_UNITS), jnp.float32, -lim1, lim1)
    b1 = jax.random.uniform(kb1, (1, OUT_UNITS), jnp.float32, -lim1, lim1)
    vw_row = jax.random.uniform(kvw, (1, OUT_UNITS), jnp.float32, -limv, limv)
    bv = jax.random.uniform(kbv, (1, 1), jnp.float32, -limv, limv)

    ctx, score = self_attention(query, values, w1_t, b1, vw_row, bv)
    jax.block_until_ready((ctx, score))

    ctx_ref, score_ref = reference(query, values, w1_t, b1, vw_row, bv)
    assert np.allclose(np.asarray(ctx), np.asarray(ctx_ref), atol=1e-5, rtol=1e-5)
    assert np.allclose(np.asarray(score), np.asarray(score_ref), atol=1e-5, rtol=1e-5)

    print("KERNEL_OK")
</pallas_src>

<mosaic_0001>
module attributes {stable_mosaic.version = 11 : i64} {
  func.func @self_attention_kernel(%arg0: memref<64x32xf32, #tpu.memory_space<vmem>>, %arg1: memref<8x8x16xf32, #tpu.memory_space<vmem>>, %arg2: memref<32x16xf32, #tpu.memory_space<vmem>>, %arg3: memref<1x16xf32, #tpu.memory_space<vmem>>, %arg4: memref<1x16xf32, #tpu.memory_space<vmem>>, %arg5: memref<1x1xf32, #tpu.memory_space<smem>>, %arg6: memref<8x16xf32, #tpu.memory_space<vmem>>, %arg7: memref<8x8xf32, #tpu.memory_space<vmem>>) attributes {dimension_semantics = [], scalar_prefetch = 0 : i64, scratch_operands = 0 : i64, tpu.core_type = #tpu.core_type<tc>} {
    %c0 = arith.constant 0 : index
    %c0_0 = arith.constant 0 : index
    %0 = vector.load %arg0[%c0, %c0_0] : memref<64x32xf32, #tpu.memory_space<vmem>>, vector<64x32xf32>
    %c0_1 = arith.constant 0 : index
    %c0_2 = arith.constant 0 : index
    %1 = vector.load %arg2[%c0_1, %c0_2] : memref<32x16xf32, #tpu.memory_space<vmem>>, vector<32x16xf32>
    %cst = arith.constant dense<0.000000e+00> : vector<64x16xf32>
    %2 = tpu.matmul %0, %1, %cst {dimension_numbers = #tpu.dot_dimension_numbers<[1], [0], [0], [1], [0, 0, 1, 1], [], []>} : vector<64x32xf32>, vector<32x16xf32>, vector<64x16xf32> -> vector<64x16xf32>
    %c0_3 = arith.constant 0 : index
    %c0_4 = arith.constant 0 : index
    %3 = vector.load %arg3[%c0_3, %c0_4] : memref<1x16xf32, #tpu.memory_space<vmem>>, vector<1x16xf32>
    %4 = vector.broadcast %3 : vector<1x16xf32> to vector<64x16xf32>
    %5 = arith.addf %2, %4 : vector<64x16xf32>
    %6 = math.tanh %5 : vector<64x16xf32>
    %c0_5 = arith.constant 0 : index
    %c0_6 = arith.constant 0 : index
    %7 = vector.load %arg4[%c0_5, %c0_6] : memref<1x16xf32, #tpu.memory_space<vmem>>, vector<1x16xf32>
    %8 = vector.broadcast %7 : vector<1x16xf32> to vector<64x16xf32>
    %9 = arith.mulf %6, %8 : vector<64x16xf32>
    %cst_7 = arith.constant dense<0.000000e+00> : vector<64xf32>
    %10 = vector.multi_reduction <add>, %9, %cst_7 [1] : vector<64x16xf32> to vector<64xf32>
    %11 = vector.shape_cast %10 : vector<64xf32> to vector<64x1xf32>
    %c0_8 = arith.constant 0 : index
    %c0_9 = arith.constant 0 : index
    %12 = memref.load %arg5[%c0_8, %c0_9] : memref<1x1xf32, #tpu.memory_space<smem>>
    %13 = vector.broadcast %12 : f32 to vector<64x1xf32>
    %14 = arith.addf %11, %13 : vector<64x1xf32>
    %15 = arith.negf %14 : vector<64x1xf32>
    %16 = math.exp %15 : vector<64x1xf32>
    %cst_10 = arith.constant 1.000000e+00 : f32
    %17 = vector.broadcast %cst_10 : f32 to vector<64x1xf32>
    %18 = arith.addf %17, %16 : vector<64x1xf32>
    %19 = arith.divf %17, %18 : vector<64x1xf32>
    %20 = vector.shape_cast %19 : vector<64x1xf32> to vector<8x8xf32>
    %c0_11 = arith.constant 0 : index
    %c0_12 = arith.constant 0 : index
    %21 = vector.load %arg7[%c0_11, %c0_12] : memref<8x8xf32, #tpu.memory_space<vmem>>, vector<8x8xf32>
    tpu.vector_store %arg7[%c0_11, %c0_12], %20 {strides = array<i32>} : memref<8x8xf32, #tpu.memory_space<vmem>>, vector<8x8xf32>,
    %cst_13 = arith.constant dense<0.000000e+00> : vector<8xf32>
    %22 = vector.multi_reduction <add>, %20, %cst_13 [1] : vector<8x8xf32> to vector<8xf32>
    %23 = vector.shape_cast %22 : vector<8xf32> to vector<8x1xf32>
    %24 = tpu.reciprocal %23 : vector<8x1xf32> -> vector<8x1xf32>
    %25 = vector.shape_cast %24 : vector<8x1xf32> to vector<1x8xf32>
    %26 = vector.broadcast %25 : vector<1x8xf32> to vector<8x8xf32>
    %27 = arith.mulf %20, %26 : vector<8x8xf32>
    %28 = vector.shape_cast %27 : vector<8x8xf32> to vector<8x8x1xf32>
    %c0_14 = arith.constant 0 : index
    %c0_15 = arith.constant 0 : index
    %c0_16 = arith.constant 0 : index
    %29 = vector.load %arg1[%c0_14, %c0_15, %c0_16] : memref<8x8x16xf32, #tpu.memory_space<vmem>>, vector<8x8x16xf32>
    %30 = vector.broadcast %28 : vector<8x8x1xf32> to vector<8x8x16xf32>
    %31 = arith.mulf %30, %29 : vector<8x8x16xf32>
    %cst_17 = arith.constant dense<0.000000e+00> : vector<8x16xf32>
    %32 = vector.multi_reduction <add>, %31, %cst_17 [1] : vector<8x8x16xf32> to vector<8x16xf32>
    %c0_18 = arith.constant 0 : index
    %c0_19 = arith.constant 0 : index
    %33 = vector.load %arg6[%c0_18, %c0_19] : memref<8x16xf32, #tpu.memory_space<vmem>>, vector<8x16xf32>
    tpu.vector_store %arg6[%c0_18, %c0_19], %32 {strides = array<i32>} : memref<8x16xf32, #tpu.memory_space<vmem>>, vector<8x16xf32>,
    return
  }
}

</mosaic_0001>

<llo_original>
// kernel: tpu_custom_call.1
$region0: #{tpu_custom_call.1}
  #allocation0 [shape = 'u32[]', space=smem, size = 0x4, offset = 0x4, fixed_abs, tag = 'smem constant byte address 0x4 - core index']
  #allocation1 [shape = 'u32[72,128]{1,0:T(1,128)}', space=vmem, size = 0x9000, scoped, tag = 'internal scratch']
  #allocation2 [shape = 'f32[1,1]{1,0:T(1,128)S(6)}', space=smem, size = 0x200, scoped, tag = 'scoped memory for tpu_custom_call.1']
  %s0 = inlined_call_operand.vmem [shape: f32[64,32], index: 0, kind: input, shape index: {}]
  %s1 = inlined_call_operand.vmem [shape: f32[8,8,16], index: 1, kind: input, shape index: {}]
  %s2 = inlined_call_operand.vmem [shape: f32[32,16], index: 2, kind: input, shape index: {}]
  %s3 = inlined_call_operand.vmem [shape: f32[1,16], index: 3, kind: input, shape index: {}]
  %s4 = inlined_call_operand.vmem [shape: f32[1,16], index: 4, kind: input, shape index: {}]
  %s5 = inlined_call_operand.<no memory space> [shape: f32[1,1], index: 5, kind: input, shape index: {}]
  %s6 = inlined_call_operand.hbm [shape: f32[8,16], index: 6, kind: output, shape index: {0}]
  %s7 = inlined_call_operand.hbm [shape: f32[8,8], index: 7, kind: output, shape index: {1}]
  %8 = xla_tuple %s6, %s7
  %s9 = sld [smem:[#allocation0]]
  $region42: #{tpu_custom_call.1} parent=0
    _
  %s11 = ssub.s32 1, %s9
  %s12 = scalar_select 0, %s11, %s9
  %13 = sst [smem:[#allocation2]] %s5
  $region1: #{tpu_custom_call.1} parent=0
    #allocation3 [shape = 'u8[4096]{0}', space=vmem, size = 0x1000, scoped, tag = 'output window, operand 0, single buffered']
    #allocation4 [shape = 's32[1]{0}', space=sflag, size = 0x4, scoped, tag = 'scoped memory for tpu_custom_call.1']
    #allocation5 [shape = 'u8[4096]{0}', space=vmem, size = 0x1000, scoped, tag = 'output window, operand 1, single buffered']
    #allocation6 [shape = 's32[1]{0}', space=sflag, size = 0x4, scoped, tag = 'scoped memory for tpu_custom_call.1']
    %14 = vsyncpa [#allocation4], 0
    %15 = vsyncpa [#allocation6], 0
    // Predicated region
    $region2: #{tpu_custom_call.1} parent=1 // pred_check
      _
    $region3: #{tpu_custom_call.1} parent=1 // pred_check_branch
      %17 = sbr.rel (0) target = $region5
    $region4: #{tpu_custom_call.1} parent=1 // pred_region
      _
    $region5: #{tpu_custom_call.1} parent=1 // pred_fallthru
      _
    // Predicated region
    $region6: #{tpu_custom_call.1} parent=1 // pred_check
      _
    $region7: #{tpu_custom_call.1} parent=1 // pred_check_branch
      %19 = sbr.rel (0) target = $region9
    $region8: #{tpu_custom_call.1} parent=1 // pred_region
      _
    $region9: #{tpu_custom_call.1} parent=1 // pred_fallthru
      _
    // Predicated region
    $region10: #{tpu_custom_call.1} parent=1 // pred_check
      _
    $region11: #{tpu_custom_call.1} parent=1 // pred_check_branch
      %21 = sbr.rel (0) target = $region13
    $region12: #{tpu_custom_call.1} parent=1 // pred_region
      _
    $region13: #{tpu_custom_call.1} parent=1 // pred_fallthru
      _
    // Predicated region
    $region14: #{tpu_custom_call.1} parent=1 // pred_check
      _
    $region15: #{tpu_custom_call.1} parent=1 // pred_check_branch
      %23 = sbr.rel (0) target = $region17
    $region16: #{tpu_custom_call.1} parent=1 // pred_region
      _
    $region17: #{tpu_custom_call.1} parent=1 // pred_fallthru
      _
    // Predicated region
    $region18: #{tpu_custom_call.1} parent=1 // pred_check
      _
    $region19: #{tpu_custom_call.1} parent=1 // pred_check_branch
      %25 = sbr.rel (0) target = $region21
    $region20: #{tpu_custom_call.1} parent=1 // pred_region
      _
    $region21: #{tpu_custom_call.1} parent=1 // pred_fallthru
      _
    // Predicated region
    $region22: #{tpu_custom_call.1} parent=1 // pred_check
      _
    $region23: #{tpu_custom_call.1} parent=1 // pred_check_branch
      %27 = sbr.rel (0) target = $region25
    $region24: #{tpu_custom_call.1} parent=1 // pred_region
      _
    $region25: #{tpu_custom_call.1} parent=1 // pred_fallthru
      _
    %v28 = vld [vmem:[%s0] sm:$0xff]
    %v29 = vld [vmem:[%s0 + $0x8] sm:$0xff]
    %v30 = vld [vmem:[%s0 + $0x10] sm:$0xff]
    %v31 = vld [vmem:[%s0 + $0x18] sm:$0xff]
    %v32 = vld [vmem:[%s0 + $0x20] sm:$0xff]
    %v33 = vld [vmem:[%s0 + $0x28] sm:$0xff]
    %v34 = vld [vmem:[%s0 + $0x30] sm:$0xff]
    %v35 = vld [vmem:[%s0 + $0x38] sm:$0xff]
    %v36 = vld [vmem:[%s2] sm:$0xff]
    %v37 = vld [vmem:[%s2 + $0x8] sm:$0xff]
    %v38 = vld [vmem:[%s2 + $0x10] sm:$0xff]
    %v39 = vld [vmem:[%s2 + $0x18] sm:$0xff]
    %v40 = vld [vmem:[%s3] sm:$0x1]
    %v42 = vperm.slane %v40, 0
    %vm44 = vcmask 261120
    %v46 = vsel %vm44, %v28, 0
    %v49 = vsel %vm44, %v29, 0
    %v52 = vsel %vm44, %v30, 0
    %v55 = vsel %vm44, %v31, 0
    %v58 = vsel %vm44, %v32, 0
    %v61 = vsel %vm44, %v33, 0
    %v64 = vsel %vm44, %v34, 0
    %v67 = vsel %vm44, %v35, 0
    %69 = vmatpush.msra.mxu0 0.0
    %70 = vmatpush.msra.mxu0 0.0
    %71 = vmatpush.msra.mxu0 0.0
    %72 = vmatpush.msra.mxu0 0.0
    %73 = vmatpush.msra.mxu0 0.0
    %74 = vmatpush.msra.mxu0 0.0
    %75 = vmatpush.msra.mxu0 0.0
    %76 = vmatpush.msra.mxu0 0.0
    %77 = vmatpush.msra.mxu0 0.0
    %78 = vmatpush.msra.mxu0 0.0
    %79 = vmatpush.msra.mxu0 0.0
    %80 = vmatpush.msra.mxu0 0.0
    %81 = vmatpush.msra.mxu0 %v39
    %82 = vmatpush.msra.mxu0 %v38
    %83 = vmatpush.msra.mxu0 %v37
    %84 = vmatpush.msra.mxu0 %v36
    %85 = vmatmul.f32.gmra.mxu0 %v46
    %v86 = vpop.f32.mrf.mxu0
    %v87 = vadd.f32 %v42, %v86
    %88 = vmatmul.f32.gmra.mxu0 %v49
    %v89 = vpop.f32.mrf.mxu0
    %v90 = vadd.f32 %v42, %v89
    %91 = vmatmul.f32.gmra.mxu0 %v52
    %v92 = vpop.f32.mrf.mxu0
    %v93 = vadd.f32 %v42, %v92
    %94 = vmatmul.f32.gmra.mxu0 %v55
    %v95 = vpop.f32.mrf.mxu0
    %v96 = vadd.f32 %v42, %v95
    %97 = vmatmul.f32.gmra.mxu0 %v58
    %v98 = vpop.f32.mrf.mxu0
    %v99 = vadd.f32 %v42, %v98
    %100 = vmatmul.f32.gmra.mxu0 %v61
    %v101 = vpop.f32.mrf.mxu0
    %v102 = vadd.f32 %v42, %v101
    %103 = vmatmul.f32.gmra.mxu0 %v64
    %v104 = vpop.f32.mrf.mxu0
    %v105 = vadd.f32 %v42, %v104
    %106 = vmatmul.f32.gmra.mxu0 %v67
    %v107 = vpop.f32.mrf.mxu0
    %v108 = vadd.f32 %v42, %v107
    %109 = vdwg.mxu0
    %v110 = vtanh.pop %v87
    %v111 = vtanh.pop %v90
    %v112 = vtanh.pop %v93
    %v113 = vtanh.pop %v96
    %v114 = vtanh.pop %v99
    %v115 = vtanh.pop %v102
    %v116 = vtanh.pop %v105
    %v117 = vtanh.pop %v108
    %v118 = vld [vmem:[%s4] sm:$0x1]
    %v120 = vperm.slane %v118, 0
    %v122 = vmul.f32 %v110, %v120
    %v123 = vmul.f32 %v111, %v120
    %v124 = vmul.f32 %v112, %v120
    %v125 = vmul.f32 %v113, %v120
    %v126 = vmul.f32 %v114, %v120
    %v127 = vmul.f32 %v115, %v120
    %v128 = vmul.f32 %v116, %v120
    %v129 = vmul.f32 %v117, %v120
    %vm130 = vcmask 130048
    %v131 = vsel %vm130, %v122, 0.0
    %132 = vadd.xlane.f32.xlu0 %v131
    %v133 = vpop.xlane.xlu0 %132
    %v134 = vsel %vm130, %v123, 0.0
    %135 = vadd.xlane.f32.xlu0 %v134
    %v136 = vpop.xlane.xlu0 %135
    %v137 = vsel %vm130, %v124, 0.0
    %138 = vadd.xlane.f32.xlu0 %v137
    %v139 = vpop.xlane.xlu0 %138
    %v140 = vsel %vm130, %v125, 0.0
    %141 = vadd.xlane.f32.xlu0 %v140
    %v142 = vpop.xlane.xlu0 %141
    %v143 = vsel %vm130, %v126, 0.0
    %144 = vadd.xlane.f32.xlu0 %v143
    %v145 = vpop.xlane.xlu0 %144
    %v146 = vsel %vm130, %v127, 0.0
    %147 = vadd.xlane.f32.xlu0 %v146
    %v148 = vpop.xlane.xlu0 %147
    %v149 = vsel %vm130, %v128, 0.0
    %150 = vadd.xlane.f32.xlu0 %v149
    %v151 = vpop.xlane.xlu0 %150
    %v152 = vsel %vm130, %v129, 0.0
    %153 = vadd.xlane.f32.xlu0 %v152
    %v154 = vpop.xlane.xlu0 %153
    %s155 = sld [smem:[#allocation2]]
    %v156 = vstv %s155
    %v157 = vadd.f32 %v133, %v156
    %v158 = vadd.f32 %v136, %v156
    %v159 = vadd.f32 %v139, %v156
    %v160 = vadd.f32 %v142, %v156
    %v161 = vadd.f32 %v145, %v156
    %v162 = vadd.f32 %v148, %v156
    %v163 = vadd.f32 %v151, %v156
    %v164 = vadd.f32 %v154, %v156
    %v165 = vxor.u32 %v157, 2147483648
    %v166 = vxor.u32 %v158, 2147483648
    %v167 = vxor.u32 %v159, 2147483648
    %v168 = vxor.u32 %v160, 2147483648
    %v169 = vxor.u32 %v161, 2147483648
    %v170 = vxor.u32 %v162, 2147483648
    %v171 = vxor.u32 %v163, 2147483648
    %v172 = vxor.u32 %v164, 2147483648
    %v173 = vmul.f32 %v165, 1.442695
    %v174 = vpow.pop %v173
    %v175 = vmul.f32 %v166, 1.442695
    %v176 = vpow.pop %v175
    %v177 = vmul.f32 %v167, 1.442695
    %v178 = vpow.pop %v177
    %v179 = vmul.f32 %v168, 1.442695
    %v180 = vpow.pop %v179
    %v181 = vmul.f32 %v169, 1.442695
    %v182 = vpow.pop %v181
    %v183 = vmul.f32 %v170, 1.442695
    %v184 = vpow.pop %v183
    %v185 = vmul.f32 %v171, 1.442695
    %v186 = vpow.pop %v185
    %v187 = vmul.f32 %v172, 1.442695
    %v188 = vpow.pop %v187
    %v189 = vadd.f32 %v174, 1.0
    %v190 = vadd.f32 %v176, 1.0
    %v191 = vadd.f32 %v178, 1.0
    %v192 = vadd.f32 %v180, 1.0
    %v193 = vadd.f32 %v182, 1.0
    %v194 = vadd.f32 %v184, 1.0
    %v195 = vadd.f32 %v186, 1.0
    %v196 = vadd.f32 %v188, 1.0
    %v197 = vrcp.pop %v189
    %v198 = vmul.f32 %v189, %v197
    %v199 = vsub.f32 1.0, %v198
    %v200 = vmul.f32 %v197, %v199
    %v201 = vadd.f32 %v197, %v200
    %vm202 = vweird.f32 %v189
    %vm203 = vweird.f32 %v197
    %vm204 = vmor %vm202, %vm203
    %v205 = vsel %vm204, %v197, %v201
    %v206 = vand.u32 2147483647, %v189
    %vm207 = vcmp.eq.f32.partialorder %v206, 8.507059e+37
    %v208 = vand.u32 %v189, 2147483648
    %v209 = vor.u32 1.1754944e-38, %v208
    %v210 = vsel %vm207, %v209, %v205
    %v211 = vmul.f32 1.0, %v210
    %v212 = vrcp.pop %v190
    %v213 = vmul.f32 %v190, %v212
    %v214 = vsub.f32 1.0, %v213
    %v215 = vmul.f32 %v212, %v214
    %v216 = vadd.f32 %v212, %v215
    %vm217 = vweird.f32 %v190
    %vm218 = vweird.f32 %v212
    %vm219 = vmor %vm217, %vm218
    %v220 = vsel %vm219, %v212, %v216
    %v221 = vand.u32 2147483647, %v190
    %vm222 = vcmp.eq.f32.partialorder %v221, 8.507059e+37
    %v223 = vand.u32 %v190, 2147483648
    %v224 = vor.u32 1.1754944e-38, %v223
    %v225 = vsel %vm222, %v224, %v220
    %v226 = vmul.f32 1.0, %v225
    %v227 = vrcp.pop %v191
    %v228 = vmul.f32 %v191, %v227
    %v229 = vsub.f32 1.0, %v228
    %v230 = vmul.f32 %v227, %v229
    %v231 = vadd.f32 %v227, %v230
    %vm232 = vweird.f32 %v191
    %vm233 = vweird.f32 %v227
    %vm234 = vmor %vm232, %vm233
    %v235 = vsel %vm234, %v227, %v231
    %v236 = vand.u32 2147483647, %v191
    %vm237 = vcmp.eq.f32.partialorder %v236, 8.507059e+37
    %v238 = vand.u32 %v191, 2147483648
    %v239 = vor.u32 1.1754944e-38, %v238
    %v240 = vsel %vm237, %v239, %v235
    %v241 = vmul.f32 1.0, %v240
    %v242 = vrcp.pop %v192
    %v243 = vmul.f32 %v192, %v242
    %v244 = vsub.f32 1.0, %v243
    %v245 = vmul.f32 %v242, %v244
    %v246 = vadd.f32 %v242, %v245
    %vm247 = vweird.f32 %v192
    %vm248 = vweird.f32 %v242
    %vm249 = vmor %vm247, %vm248
    %v250 = vsel %vm249, %v242, %v246
    %v251 = vand.u32 2147483647, %v192
    %vm252 = vcmp.eq.f32.partialorder %v251, 8.507059e+37
    %v253 = vand.u32 %v192, 2147483648
    %v254 = vor.u32 1.1754944e-38, %v253
    %v255 = vsel %vm252, %v254, %v250
    %v256 = vmul.f32 1.0, %v255
    %v257 = vrcp.pop %v193
    %v258 = vmul.f32 %v193, %v257
    %v259 = vsub.f32 1.0, %v258
    %v260 = vmul.f32 %v257, %v259
    %v261 = vadd.f32 %v257, %v260
    %vm262 = vweird.f32 %v193
    %vm263 = vweird.f32 %v257
    %vm264 = vmor %vm262, %vm263
    %v265 = vsel %vm264, %v257, %v261
    %v266 = vand.u32 2147483647, %v193
    %vm267 = vcmp.eq.f32.partialorder %v266, 8.507059e+37
    %v268 = vand.u32 %v193, 2147483648
    %v269 = vor.u32 1.1754944e-38, %v268
    %v270 = vsel %vm267, %v269, %v265
    %v271 = vmul.f32 1.0, %v270
    %v272 = vrcp.pop %v194
    %v273 = vmul.f32 %v194, %v272
    %v274 = vsub.f32 1.0, %v273
    %v275 = vmul.f32 %v272, %v274
    %v276 = vadd.f32 %v272, %v275
    %vm277 = vweird.f32 %v194
    %vm278 = vweird.f32 %v272
    %vm279 = vmor %vm277, %vm278
    %v280 = vsel %vm279, %v272, %v276
    %v281 = vand.u32 2147483647, %v194
    %vm282 = vcmp.eq.f32.partialorder %v281, 8.507059e+37
    %v283 = vand.u32 %v194, 2147483648
    %v284 = vor.u32 1.1754944e-38, %v283
    %v285 = vsel %vm282, %v284, %v280
    %v286 = vmul.f32 1.0, %v285
    %v287 = vrcp.pop %v195
    %v288 = vmul.f32 %v195, %v287
    %v289 = vsub.f32 1.0, %v288
    %v290 = vmul.f32 %v287, %v289
    %v291 = vadd.f32 %v287, %v290
    %vm292 = vweird.f32 %v195
    %vm293 = vweird.f32 %v287
    %vm294 = vmor %vm292, %vm293
    %v295 = vsel %vm294, %v287, %v291
    %v296 = vand.u32 2147483647, %v195
    %vm297 = vcmp.eq.f32.partialorder %v296, 8.507059e+37
    %v298 = vand.u32 %v195, 2147483648
    %v299 = vor.u32 1.1754944e-38, %v298
    %v300 = vsel %vm297, %v299, %v295
    %v301 = vmul.f32 1.0, %v300
    %v302 = vrcp.pop %v196
    %v303 = vmul.f32 %v196, %v302
    %v304 = vsub.f32 1.0, %v303
    %v305 = vmul.f32 %v302, %v304
    %v306 = vadd.f32 %v302, %v305
    %vm307 = vweird.f32 %v196
    %vm308 = vweird.f32 %v302
    %vm309 = vmor %vm307, %vm308
    %v310 = vsel %vm309, %v302, %v306
    %v311 = vand.u32 2147483647, %v196
    %vm312 = vcmp.eq.f32.partialorder %v311, 8.507059e+37
    %v313 = vand.u32 %v196, 2147483648
    %v314 = vor.u32 1.1754944e-38, %v313
    %v315 = vsel %vm312, %v314, %v310
    %v316 = vmul.f32 1.0, %v315
    %v325 = vlaneseq
    %v326 = vand.u32 %v325, 127
    %v327 = vperm.slane %v211, %v326
    %v328 = vperm.slane %v226, %v326
    %v329 = vperm.slane %v241, %v326
    %v330 = vperm.slane %v256, %v326
    %v331 = vperm.slane %v271, %v326
    %v332 = vperm.slane %v286, %v326
    %v333 = vperm.slane %v301, %v326
    %v334 = vperm.slane %v316, %v326
    %vm335 = vcmask 1041409
    %v336 = vsel %vm335, %v328, %v327
    %vm337 = vcmask 1042434
    %v338 = vsel %vm337, %v329, %v336
    %vm339 = vcmask 1043459
    %v340 = vsel %vm339, %v330, %v338
    %vm341 = vcmask 1044484
    %v342 = vsel %vm341, %v331, %v340
    %vm343 = vcmask 1045509
    %v344 = vsel %vm343, %v332, %v342
    %vm345 = vcmask 1046534
    %v346 = vsel %vm345, %v333, %v344
    %vm347 = vcmask 1047559
    %v348 = vsel %vm347, %v334, %v346
    %vm350 = vcmask 64512
    %351 = vst.msk [vmem:[#allocation5] sm:$0xff] %vm350, %v348
    %v352 = vsel %vm350, %v348, 0.0
    %353 = vadd.xlane.f32.xlu0 %v352
    %v354 = vpop.xlane.xlu0 %353
    %v355 = vrcp.pop %v354
    %v356 = vmul.f32 %v354, %v355
    %v357 = vsub.f32 1.0, %v356
    %v358 = vmul.f32 %v355, %v357
    %v359 = vadd.f32 %v355, %v358
    %vm360 = vweird.f32 %v354
    %vm361 = vweird.f32 %v355
    %vm362 = vmor %vm360, %vm361
    %v363 = vsel %vm362, %v355, %v359
    %v364 = vand.u32 2147483647, %v354
    %vm365 = vcmp.eq.f32.partialorder %v364, 8.507059e+37
    %v366 = vand.u32 %v354, 2147483648
    %v367 = vor.u32 1.1754944e-38, %v366
    %v368 = vsel %vm365, %v367, %v363
    %v369 = vmul.f32 %v211, %v368
    %v370 = vmul.f32 %v226, %v368
    %v371 = vmul.f32 %v241, %v368
    %v372 = vmul.f32 %v256, %v368
    %v373 = vmul.f32 %v271, %v368
    %v374 = vmul.f32 %v286, %v368
    %v375 = vmul.f32 %v301, %v368
    %v376 = vmul.f32 %v316, %v368
    %v377 = vld [vmem:[%s1] sm:$0xff]
    %v378 = vld [vmem:[%s1 + $0x8] sm:$0xff]
    %v379 = vld [vmem:[%s1 + $0x10] sm:$0xff]
    %v380 = vld [vmem:[%s1 + $0x18] sm:$0xff]
    %v381 = vld [vmem:[%s1 + $0x20] sm:$0xff]
    %v382 = vld [vmem:[%s1 + $0x28] sm:$0xff]
    %v383 = vld [vmem:[%s1 + $0x30] sm:$0xff]
    %v384 = vld [vmem:[%s1 + $0x38] sm:$0xff]
    %v385 = vmul.f32 %v369, %v377
    %v386 = vmul.f32 %v370, %v378
    %v387 = vmul.f32 %v371, %v379
    %v388 = vmul.f32 %v372, %v380
    %v389 = vmul.f32 %v373, %v381
    %v390 = vmul.f32 %v374, %v382
    %v391 = vmul.f32 %v375, %v383
    %v392 = vmul.f32 %v376, %v384
    %v393 = vsel %vm130, %v385, 0.0
    %v394 = vrot.slane %v393, 4
    %v395 = vadd.f32 %v393, %v394
    %v396 = vrot.slane %v395, 2
    %v397 = vadd.f32 %v395, %v396
    %v398 = vrot.slane %v397, 1
    %v399 = vadd.f32 %v397, %v398
    %v400 = vsel %vm130, %v386, 0.0
    %v401 = vrot.slane %v400, 4
    %v402 = vadd.f32 %v400, %v401
    %v403 = vrot.slane %v402, 2
    %v404 = vadd.f32 %v402, %v403
    %v405 = vrot.slane %v404, 1
    %v406 = vadd.f32 %v404, %v405
    %v407 = vsel %vm130, %v387, 0.0
    %v408 = vrot.slane %v407, 4
    %v409 = vadd.f32 %v407, %v408
    %v410 = vrot.slane %v409, 2
    %v411 = vadd.f32 %v409, %v410
    %v412 = vrot.slane %v411, 1
    %v413 = vadd.f32 %v411, %v412
    %v414 = vsel %vm130, %v388, 0.0
    %v415 = vrot.slane %v414, 4
    %v416 = vadd.f32 %v414, %v415
    %v417 = vrot.slane %v416, 2
    %v418 = vadd.f32 %v416, %v417
    %v419 = vrot.slane %v418, 1
    %v420 = vadd.f32 %v418, %v419
    %v421 = vsel %vm130, %v389, 0.0
    %v422 = vrot.slane %v421, 4
    %v423 = vadd.f32 %v421, %v422
    %v424 = vrot.slane %v423, 2
    %v425 = vadd.f32 %v423, %v424
    %v426 = vrot.slane %v425, 1
    %v427 = vadd.f32 %v425, %v426
    %v428 = vsel %vm130, %v390, 0.0
    %v429 = vrot.slane %v428, 4
    %v430 = vadd.f32 %v428, %v429
    %v431 = vrot.slane %v430, 2
    %v432 = vadd.f32 %v430, %v431
    %v433 = vrot.slane %v432, 1
    %v434 = vadd.f32 %v432, %v433
    %v435 = vsel %vm130, %v391, 0.0
    %v436 = vrot.slane %v435, 4
    %v437 = vadd.f32 %v435, %v436
    %v438 = vrot.slane %v437, 2
    %v439 = vadd.f32 %v437, %v438
    %v440 = vrot.slane %v439, 1
    %v441 = vadd.f32 %v439, %v440
    %v442 = vsel %vm130, %v392, 0.0
    %v443 = vrot.slane %v442, 4
    %v444 = vadd.f32 %v442, %v443
    %v445 = vrot.slane %v444, 2
    %v446 = vadd.f32 %v444, %v445
    %v447 = vrot.slane %v446, 1
    %v448 = vadd.f32 %v446, %v447
    %v457 = vsel %vm335, %v406, %v399
    %v458 = vsel %vm337, %v413, %v457
    %v459 = vsel %vm339, %v420, %v458
    %v460 = vsel %vm341, %v427, %v459
    %v461 = vsel %vm343, %v434, %v460
    %v462 = vsel %vm345, %v441, %v461
    %v463 = vsel %vm347, %v448, %v462
    %465 = vst.msk [vmem:[#allocation3] sm:$0xff] %vm130, %v463
    // Predicated region
    $region26: #{tpu_custom_call.1} parent=1 // pred_check
      _
    $region27: #{tpu_custom_call.1} parent=1 // pred_check_branch
      %467 = sbr.rel (0) target = $region29
    $region28: #{tpu_custom_call.1} parent=1 // pred_region
      %469 = vsyncadd [#allocation4], 0
      %s471 = sshll.u32 [#allocation3], 4
      %s472 = int_to_ptr.vmem [resolvable:$true] %s471
      %s473 = sshll.u32 %s6, 4
      %s474 = int_to_ptr.hbm [resolvable:$true] %s473
      %476 = dma.vmem_to_hbm [thread:$0]  %s472, 128, %s474, [#allocation4]
    $region29: #{tpu_custom_call.1} parent=1 // pred_fallthru
      _
    // Predicated region
    $region30: #{tpu_custom_call.1} parent=1 // pred_check
      _
    $region31: #{tpu_custom_call.1} parent=1 // pred_check_branch
      %478 = sbr.rel (0) target = $region33
    $region32: #{tpu_custom_call.1} parent=1 // pred_region
      %480 = vsyncadd [#allocation6], 0
      %s482 = sshll.u32 [#allocation5], 4
      %s483 = int_to_ptr.vmem [resolvable:$true] %s482
      %s484 = sshll.u32 %s7, 4
      %s485 = int_to_ptr.hbm [resolvable:$true] %s484
      %487 = dma.vmem_to_hbm [thread:$0]  %s483, 128, %s485, [#allocation6]
    $region33: #{tpu_custom_call.1} parent=1 // pred_fallthru
      _
    // Predicated region
    $region34: #{tpu_custom_call.1} parent=1 // pred_check
      _
    $region35: #{tpu_custom_call.1} parent=1 // pred_check_branch
      %489 = sbr.rel (0) target = $region37
    $region36: #{tpu_custom_call.1} parent=1 // pred_region
      %491 = dma.done [#allocation4], 128
    $region37: #{tpu_custom_call.1} parent=1 // pred_fallthru
      _
    // Predicated region
    $region38: #{tpu_custom_call.1} parent=1 // pred_check
      _
    $region39: #{tpu_custom_call.1} parent=1 // pred_check_branch
      %493 = sbr.rel (0) target = $region41
    $region40: #{tpu_custom_call.1} parent=1 // pred_region
      %495 = dma.done [#allocation6], 128
    $region41: #{tpu_custom_call.1} parent=1 // pred_fallthru
      _
    %496 = vsyncpa [#allocation4], 1
    %497 = vsyncpa [#allocation6], 1

</llo_original>
